<compile_context>
chip_gen: v7x
topology: tpu7x:2x2x1
jax: 0.10.0
libtpu: 0.0.40
codegen_flags: <defaults>
</compile_context>

<pallas_src>
import functools
import math

import jax
import jax.numpy as jnp
from jax.experimental import pallas as pl
from jax.experimental.pallas import tpu as pltpu


_TARGET_TILE_BYTES = 8 * 1024 * 1024   # per-step DMA size to aim for
_TEMP_BYTES_PER_ELEM = 8               # ~2 f32 tiles of in-kernel temporaries


def _round_up(n, m):
    return ((n + m - 1) // m) * m


def _vmem_capacity_bytes():
    try:
        return int(pltpu.get_tpu_info().vmem_capacity_bytes)
    except Exception:
        return 64 * 1024 * 1024        # conservative (v7x-sized) fallback


# ------------------------------------------------------------------ kernels --

def _cbam_fused_kernel(x_ref, w1t_ref, b1_ref, w2t_ref, b2_ref, wc_ref, o_ref,
                       *, inv_hw):
    """Fused path: a whole (bblk, C, HW) slab is resident in VMEM."""
    bblk, C, _ = x_ref.shape
    cdt = o_ref.dtype

    # Channel attention: global average pool -> fc1 -> relu -> fc2 (f32 accum).
    avg = jnp.sum(x_ref[...].astype(jnp.float32), axis=2) * inv_hw        # (bblk, C)
    h = jnp.dot(avg, w1t_ref[...],
                preferred_element_type=jnp.float32) + b1_ref[...]
    h = jnp.maximum(h, 0.0)                                               # (bblk, Hp)
    ca = jnp.dot(h, w2t_ref[...],
                 preferred_element_type=jnp.float32) + b2_ref[...]        # (bblk, C)

    # Spatial attention: 1x1 conv over C on the MXU, then sigmoid.
    wcb = jnp.broadcast_to(wc_ref[...].astype(cdt)[None, :, :], (bblk, 1, C))
    lin = jnp.einsum("bxc,bcs->bxs", wcb, x_ref[...],
                     preferred_element_type=jnp.float32)                  # (bblk, 1, HW)
    sa = jax.nn.sigmoid(lin)

    # Combine: single elementwise pass in the I/O dtype (reads x once more).
    o_ref[...] = (x_ref[...] * ca.astype(cdt)[:, :, None]
                  * sa.astype(cdt)).astype(cdt)


def _cbam_spatial_kernel(x_ref, ca_ref, wc_ref, o_ref):
    """Fallback path: channel attention precomputed; tile over (B, HW)."""
    cdt = o_ref.dtype
    lin = jnp.dot(wc_ref[...].astype(cdt), x_ref[...],
                  preferred_element_type=jnp.float32)                     # (1, thw)
    sa = jax.nn.sigmoid(lin)
    o_ref[...] = (x_ref[...] * ca_ref[...].astype(cdt)
                  * sa.astype(cdt)).astype(cdt)


# ------------------------------------------------------------------ wrapper --

def _choose_batch_block(B, per_batch_io_bytes, per_batch_tmp_bytes,
                        weight_bytes, budget_bytes):
    """Pick bblk so that (double-buffered I/O + in-kernel temps + weights)
    fits the budget, >= 4 grid steps remain when B >= 4 (v7x megacore), and
    the per-step DMA is close to the target.  None -> use HW-tiled fallback."""
    avail = budget_bytes - 2 * weight_bytes
    per_block = 4 * per_batch_io_bytes + per_batch_tmp_bytes
    if avail < per_block:
        return None
    max_fit = avail // per_block
    cap_parallel = max(1, B // 4)
    target_b = max(1, -(-_TARGET_TILE_BYTES // per_batch_io_bytes))
    return int(max(1, min(max_fit, cap_parallel, B, target_b)))


def basic_cbam(x_nchw, params, *, vmem_budget_bytes=None):
    w1, b1, w2, b2, wconv = params
    B, C, H, W = x_nchw.shape
    hidden = w1.shape[0]
    HW = H * W
    dtype = x_nchw.dtype
    itemsize = jnp.dtype(dtype).itemsize

    vmem_cap = _vmem_capacity_bytes()
    if vmem_budget_bytes is None:
        vmem_budget_bytes = min(vmem_cap * 3 // 4, vmem_cap - (12 << 20))
    vmem_budget_bytes = int(min(int(vmem_budget_bytes), vmem_cap - (8 << 20)))
    vmem_limit = int(min(vmem_budget_bytes + (8 << 20), vmem_cap - (4 << 20)))

    # Pack weights (f32; hidden dim lightly padded to a sublane multiple).
    Hp = max(8, _round_up(hidden, 8))
    w1t = jnp.zeros((C, Hp), jnp.float32).at[:, :hidden].set(
        w1.T.astype(jnp.float32))
    b1p = jnp.zeros((1, Hp), jnp.float32).at[0, :hidden].set(
        b1.astype(jnp.float32))
    w2t = jnp.zeros((Hp, C), jnp.float32).at[:hidden, :].set(
        w2.T.astype(jnp.float32))
    b2p = b2.reshape(1, C).astype(jnp.float32)
    wcr = wconv.reshape(1, C).astype(jnp.float32)

    x3 = x_nchw.reshape(B, C, HW)          # free view; no padding pass

    per_batch_io = C * HW * itemsize
    per_batch_tmp = _TEMP_BYTES_PER_ELEM * C * HW
    weight_bytes = 4 * (w1t.size + b1p.size + w2t.size + b2p.size + wcr.size)

    bblk = _choose_batch_block(B, per_batch_io, per_batch_tmp, weight_bytes,
                               vmem_budget_bytes)

    if bblk is not None:
        # ------------------------------ fused path ------------------------------
        kernel = functools.partial(_cbam_fused_kernel, inv_hw=1.0 / float(HW))
        out3 = pl.pallas_call(
            kernel,
            out_shape=jax.ShapeDtypeStruct((B, C, HW), dtype),
            grid=(pl.cdiv(B, bblk),),
            in_specs=[
                pl.BlockSpec((bblk, C, HW), lambda b: (b, 0, 0)),   # x slab
                pl.BlockSpec((C, Hp), lambda b: (0, 0)),            # fc1 weight^T
                pl.BlockSpec((1, Hp), lambda b: (0, 0)),            # fc1 bias
                pl.BlockSpec((Hp, C), lambda b: (0, 0)),            # fc2 weight^T
                pl.BlockSpec((1, C), lambda b: (0, 0)),             # fc2 bias
                pl.BlockSpec((1, C), lambda b: (0, 0)),             # 1x1 conv weight
            ],
            out_specs=pl.BlockSpec((bblk, C, HW), lambda b: (b, 0, 0)),
            compiler_params=pltpu.CompilerParams(
                dimension_semantics=("parallel",),
                vmem_limit_bytes=vmem_limit),
        )(x3, w1t, b1p, w2t, b2p, wcr)
    else:
        # ------- fallback: per-image slab too big; precompute channel att -------
        avg = jnp.mean(x_nchw, axis=(2, 3), dtype=jnp.float32)             # (B, C)
        h = jnp.maximum(avg @ w1.T.astype(jnp.float32)
                        + b1.astype(jnp.float32), 0.0)
        ca3 = (h @ w2.T.astype(jnp.float32)
               + b2.astype(jnp.float32))[:, :, None]                       # (B, C, 1)

        avail = max(0, vmem_budget_bytes - 2 * weight_bytes)
        per_col = C * (4 * itemsize + _TEMP_BYTES_PER_ELEM)
        max_thw = max(128, (avail // max(per_col, 1)) // 128 * 128)
        n_hw = max(1, -(-HW // max_thw))                 # balanced tile count
        thw = min(_round_up(HW, 128), _round_up(-(-HW // n_hw), 128))

        out3 = pl.pallas_call(
            _cbam_spatial_kernel,
            out_shape=jax.ShapeDtypeStruct((B, C, HW), dtype),
            grid=(B, pl.cdiv(HW, thw)),
            in_specs=[
                pl.BlockSpec((None, C, thw), lambda b, s: (b, 0, s)),   # x tile
                pl.BlockSpec((None, C, 1), lambda b, s: (b, 0, 0)),     # channel att
                pl.BlockSpec((1, C), lambda b, s: (0, 0)),              # conv weight
            ],
            out_specs=pl.BlockSpec((None, C, thw), lambda b, s: (b, 0, s)),
            compiler_params=pltpu.CompilerParams(
                dimension_semantics=("parallel", "parallel"),
                vmem_limit_bytes=vmem_limit),
        )(x3, ca3, wcr)

    return out3.reshape(B, C, H, W)


# ---------------------------------------------------------------- utilities --

def init_params(key, channels, reduction=16):
    """Deterministic PyTorch-default-style uniform init (raw module shapes)."""
    hidden = max(channels // reduction, 1)
    k1, k2, k3, k4, k5 = jax.random.split(key, 5)
    lim1 = 1.0 / math.sqrt(channels)
    lim2 = 1.0 / math.sqrt(hidden)
    w1 = jax.random.uniform(k1, (hidden, channels), jnp.float32, -lim1, lim1)
    b1 = jax.random.uniform(k2, (hidden,), jnp.float32, -lim1, lim1)
    w2 = jax.random.uniform(k3, (channels, hidden), jnp.float32, -lim2, lim2)
    b2 = jax.random.uniform(k4, (channels,), jnp.float32, -lim2, lim2)
    wconv = jax.random.uniform(k5, (1, channels, 1, 1), jnp.float32, -lim1, lim1)
    return w1, b1, w2, b2, wconv


def reference(x_nchw, params):
    """Pure-JAX mirror of the PyTorch forward (f32 compute)."""
    w1, b1, w2, b2, wconv = params
    xf = x_nchw.astype(jnp.float32)
    avg = jnp.mean(xf, axis=(2, 3))                                  # (B, C)
    h = jnp.maximum(avg @ w1.T + b1, 0.0)
    ca = h @ w2.T + b2                                               # (B, C)
    sa = jax.nn.sigmoid(jnp.einsum("bchw,c->bhw", xf, wconv.reshape(-1)))
    return xf * ca[:, :, None, None] * sa[:, None, :, :]


if __name__ == "__main__":
    key = jax.random.PRNGKey(0)
    k1, k2, k3, k4, k5, k6 = jax.random.split(key, 6)

    # 1) Fused path, f32, lane-dense HW (=256).
    B, C, H, W = 2, 32, 16, 16
    x = jax.random.normal(k1, (B, C, H, W), jnp.float32)
    params = init_params(k2, C, reduction=16)
    out = jax.block_until_ready(basic_cbam(x, params))
    assert out.shape == (B, C, H, W)
    assert jnp.allclose(out, reference(x, params), atol=1e-4, rtol=1e-4), \
        "fused f32 mismatch"

    # 2) Fused path with ragged HW (=143) and a partial last batch block (B=9).
    B2, C2, H2, W2 = 9, 16, 11, 13
    x2 = jax.random.normal(k3, (B2, C2, H2, W2), jnp.float32)
    params2 = init_params(k4, C2, reduction=8)
    out2 = jax.block_until_ready(basic_cbam(x2, params2))
    assert jnp.allclose(out2, reference(x2, params2), atol=1e-4, rtol=1e-4), \
        "ragged/partial-block mismatch"

    # 3) HW-tiled fallback path (tiny budget forces it); HW=576 -> masked tail.
    B3, C3, H3, W3 = 2, 16, 24, 24
    x3 = jax.random.normal(k5, (B3, C3, H3, W3), jnp.float32)
    params3 = init_params(k6, C3, reduction=8)
    out3 = jax.block_until_ready(
        basic_cbam(x3, params3, vmem_budget_bytes=64 * 1024))
    assert jnp.allclose(out3, reference(x3, params3), atol=1e-4, rtol=1e-4), \
        "spatial fallback mismatch"

    # 4) bf16 I/O on the fused path (channel attention still accumulates in f32).
    xb = x.astype(jnp.bfloat16)
    outb = jax.block_until_ready(basic_cbam(xb, params))
    assert outb.dtype == jnp.bfloat16
    assert jnp.allclose(outb.astype(jnp.float32), reference(xb, params),
                        atol=3e-2, rtol=3e-2), "bf16 mismatch"

    print("KERNEL_OK")
</pallas_src>

<mosaic_0001>
module attributes {stable_mosaic.version = 11 : i64} {
  func.func @_cbam_fused_kernel(%arg0: i32, %arg1: memref<1x32x256xf32, #tpu.memory_space<vmem>>, %arg2: memref<32x8xf32, #tpu.memory_space<vmem>>, %arg3: memref<1x8xf32, #tpu.memory_space<vmem>>, %arg4: memref<8x32xf32, #tpu.memory_space<vmem>>, %arg5: memref<1x32xf32, #tpu.memory_space<vmem>>, %arg6: memref<1x32xf32, #tpu.memory_space<vmem>>, %arg7: memref<1x32x256xf32, #tpu.memory_space<vmem>>) attributes {dimension_semantics = [#tpu.dimension_semantics<parallel>], iteration_bounds = array<i64: 2>, scalar_prefetch = 0 : i64, scratch_operands = 0 : i64, tpu.core_type = #tpu.core_type<tc>, window_params = [{transform_indices = @transform_0, window_bounds = array<i64: 1, 32, 256>}, {pipeline_mode = #tpu.pipeline_mode<synchronous>, transform_indices = @transform_1, window_bounds = array<i64: 32, 8>}, {pipeline_mode = #tpu.pipeline_mode<synchronous>, transform_indices = @transform_2, window_bounds = array<i64: 1, 8>}, {pipeline_mode = #tpu.pipeline_mode<synchronous>, transform_indices = @transform_3, window_bounds = array<i64: 8, 32>}, {pipeline_mode = #tpu.pipeline_mode<synchronous>, transform_indices = @transform_4, window_bounds = array<i64: 1, 32>}, {pipeline_mode = #tpu.pipeline_mode<synchronous>, transform_indices = @transform_5, window_bounds = array<i64: 1, 32>}, {transform_indices = @transform_6, window_bounds = array<i64: 1, 32, 256>}]} {
    %c0 = arith.constant 0 : index
    %c0_0 = arith.constant 0 : index
    %c0_1 = arith.constant 0 : index
    %0 = vector.load %arg1[%c0, %c0_0, %c0_1] : memref<1x32x256xf32, #tpu.memory_space<vmem>>, vector<1x32x256xf32>
    %cst = arith.constant dense<0.000000e+00> : vector<1x32xf32>
    %1 = vector.multi_reduction <add>, %0, %cst [2] : vector<1x32x256xf32> to vector<1x32xf32>
    %cst_2 = arith.constant 3.906250e-03 : f32
    %2 = vector.broadcast %cst_2 : f32 to vector<1x32xf32>
    %3 = arith.mulf %1, %2 : vector<1x32xf32>
    %c0_3 = arith.constant 0 : index
    %c0_4 = arith.constant 0 : index
    %4 = vector.load %arg2[%c0_3, %c0_4] : memref<32x8xf32, #tpu.memory_space<vmem>>, vector<32x8xf32>
    %cst_5 = arith.constant dense<0.000000e+00> : vector<1x8xf32>
    %5 = tpu.matmul %3, %4, %cst_5 {dimension_numbers = #tpu.dot_dimension_numbers<[1], [0], [0], [1], [0, 0, 1, 1], [], []>} : vector<1x32xf32>, vector<32x8xf32>, vector<1x8xf32> -> vector<1x8xf32>
    %c0_6 = arith.constant 0 : index
    %c0_7 = arith.constant 0 : index
    %6 = vector.load %arg3[%c0_6, %c0_7] : memref<1x8xf32, #tpu.memory_space<vmem>>, vector<1x8xf32>
    %7 = arith.addf %5, %6 : vector<1x8xf32>
    %cst_8 = arith.constant 0.000000e+00 : f32
    %8 = vector.broadcast %cst_8 : f32 to vector<1x8xf32>
    %9 = arith.maximumf %7, %8 : vector<1x8xf32>
    %c0_9 = arith.constant 0 : index
    %c0_10 = arith.constant 0 : index
    %10 = vector.load %arg4[%c0_9, %c0_10] : memref<8x32xf32, #tpu.memory_space<vmem>>, vector<8x32xf32>
    %cst_11 = arith.constant dense<0.000000e+00> : vector<1x32xf32>
    %11 = tpu.matmul %9, %10, %cst_11 {dimension_numbers = #tpu.dot_dimension_numbers<[1], [0], [0], [1], [0, 0, 1, 1], [], []>} : vector<1x8xf32>, vector<8x32xf32>, vector<1x32xf32> -> vector<1x32xf32>
    %c0_12 = arith.constant 0 : index
    %c0_13 = arith.constant 0 : index
    %12 = vector.load %arg5[%c0_12, %c0_13] : memref<1x32xf32, #tpu.memory_space<vmem>>, vector<1x32xf32>
    %13 = arith.addf %11, %12 : vector<1x32xf32>
    %c0_14 = arith.constant 0 : index
    %c0_15 = arith.constant 0 : index
    %14 = vector.load %arg6[%c0_14, %c0_15] : memref<1x32xf32, #tpu.memory_space<vmem>>, vector<1x32xf32>
    %15 = vector.shape_cast %14 : vector<1x32xf32> to vector<1x1x32xf32>
    %c0_16 = arith.constant 0 : index
    %c0_17 = arith.constant 0 : index
    %c0_18 = arith.constant 0 : index
    %16 = vector.load %arg1[%c0_16, %c0_17, %c0_18] : memref<1x32x256xf32, #tpu.memory_space<vmem>>, vector<1x32x256xf32>
    "tpu.trace_start"() <{level = 10 : i32, message = "bxc,bcs->bxs"}> : () -> ()
    %cst_19 = arith.constant dense<0.000000e+00> : vector<1x1x256xf32>
    %17 = tpu.matmul %15, %16, %cst_19 {dimension_numbers = #tpu.dot_dimension_numbers<[2], [1], [1], [2], [0, 0, 0, 1, 1, 2], [0], [0]>} : vector<1x1x32xf32>, vector<1x32x256xf32>, vector<1x1x256xf32> -> vector<1x1x256xf32>
    "tpu.trace_stop"() : () -> ()
    %18 = arith.negf %17 : vector<1x1x256xf32>
    %19 = math.exp %18 : vector<1x1x256xf32>
    %cst_20 = arith.constant 1.000000e+00 : f32
    %20 = vector.broadcast %cst_20 : f32 to vector<1x1x256xf32>
    %21 = arith.addf %20, %19 : vector<1x1x256xf32>
    %22 = arith.divf %20, %21 : vector<1x1x256xf32>
    %c0_21 = arith.constant 0 : index
    %c0_22 = arith.constant 0 : index
    %c0_23 = arith.constant 0 : index
    %23 = vector.load %arg1[%c0_21, %c0_22, %c0_23] : memref<1x32x256xf32, #tpu.memory_space<vmem>>, vector<1x32x256xf32>
    %24 = vector.shape_cast %13 : vector<1x32xf32> to vector<1x32x1xf32>
    %25 = vector.broadcast %24 : vector<1x32x1xf32> to vector<1x32x256xf32>
    %26 = arith.mulf %23, %25 : vector<1x32x256xf32>
    %27 = vector.broadcast %22 : vector<1x1x256xf32> to vector<1x32x256xf32>
    %28 = arith.mulf %26, %27 : vector<1x32x256xf32>
    %c0_24 = arith.constant 0 : index
    %c0_25 = arith.constant 0 : index
    %c0_26 = arith.constant 0 : index
    %29 = vector.load %arg7[%c0_24, %c0_25, %c0_26] : memref<1x32x256xf32, #tpu.memory_space<vmem>>, vector<1x32x256xf32>
    tpu.vector_store %arg7[%c0_24, %c0_25, %c0_26], %28 {strides = array<i32>} : memref<1x32x256xf32, #tpu.memory_space<vmem>>, vector<1x32x256xf32>,
    return
  }
  func.func @transform_0(%arg0: i32) -> (i32, i32, i32) {
    %c0_i32 = arith.constant 0 : i32
    %c0_i32_0 = arith.constant 0 : i32
    %c0_i32_1 = arith.constant 0 : i32
    return %arg0, %c0_i32, %c0_i32_0 : i32, i32, i32
  }
  func.func @transform_1(%arg0: i32) -> (i32, i32) {
    %c0_i32 = arith.constant 0 : i32
    %c0_i32_0 = arith.constant 0 : i32
    %c0_i32_1 = arith.constant 0 : i32
    return %c0_i32, %c0_i32_0 : i32, i32
  }
  func.func @transform_2(%arg0: i32) -> (i32, i32) {
    %c0_i32 = arith.constant 0 : i32
    %c0_i32_0 = arith.constant 0 : i32
    %c0_i32_1 = arith.constant 0 : i32
    return %c0_i32, %c0_i32_0 : i32, i32
  }
  func.func @transform_3(%arg0: i32) -> (i32, i32) {
    %c0_i32 = arith.constant 0 : i32
    %c0_i32_0 = arith.constant 0 : i32
    %c0_i32_1 = arith.constant 0 : i32
    return %c0_i32, %c0_i32_0 : i32, i32
  }
  func.func @transform_4(%arg0: i32) -> (i32, i32) {
    %c0_i32 = arith.constant 0 : i32
    %c0_i32_0 = arith.constant 0 : i32
    %c0_i32_1 = arith.constant 0 : i32
    return %c0_i32, %c0_i32_0 : i32, i32
  }
  func.func @transform_5(%arg0: i32) -> (i32, i32) {
    %c0_i32 = arith.constant 0 : i32
    %c0_i32_0 = arith.constant 0 : i32
    %c0_i32_1 = arith.constant 0 : i32
    return %c0_i32, %c0_i32_0 : i32, i32
  }
  func.func @transform_6(%arg0: i32) -> (i32, i32, i32) {
    %c0_i32 = arith.constant 0 : i32
    %c0_i32_0 = arith.constant 0 : i32
    %c0_i32_1 = arith.constant 0 : i32
    return %arg0, %c0_i32, %c0_i32_0 : i32, i32, i32
  }
}

</mosaic_0001>

<llo_original>
// kernel: tpu_custom_call.1
$region0: #{tpu_custom_call.1}
  #allocation0 [shape = 'u32[]', space=smem, size = 0x4, offset = 0x4, fixed_abs, tag = 'smem constant byte address 0x4 - core index']
  #allocation1 [shape = 'u32[144,128]{1,0:T(1,128)}', space=vmem, size = 0x12000, scoped, tag = 'internal scratch']
  %s0 = inlined_call_operand.hbm [shape: f32[2,32,256], index: 0, kind: input, shape index: {}]
  %s1 = inlined_call_operand.vmem [shape: f32[32,8], index: 1, kind: input, shape index: {}]
  %s2 = inlined_call_operand.vmem [shape: f32[1,8], index: 2, kind: input, shape index: {}]
  %s3 = inlined_call_operand.vmem [shape: f32[8,32], index: 3, kind: input, shape index: {}]
  %s4 = inlined_call_operand.vmem [shape: f32[1,32], index: 4, kind: input, shape index: {}]
  %s5 = inlined_call_operand.vmem [shape: f32[1,32], index: 5, kind: input, shape index: {}]
  %s6 = inlined_call_operand.hbm [shape: f32[2,32,256], index: 6, kind: output, shape index: {}]
  %s7 = sld [smem:[#allocation0]]
  $region61: #{tpu_custom_call.1} parent=0
    _
  %s9 = ssub.s32 1, %s7
  %s10 = scalar_select 0, %s9, %s7
  $region1: #{tpu_custom_call.1} parent=0
    #allocation2 [shape = 'u8[65536]{0}', space=vmem, size = 0x10000, scoped, tag = 'input window, operand 0']
    #allocation3 [shape = 's32[2]{0}', space=sflag, size = 0x8, scoped, tag = 'scoped memory for tpu_custom_call.1']
    #allocation4 [shape = 's32[2]{0}', space=sflag, size = 0x8, scoped, tag = 'scoped memory for tpu_custom_call.1']
    #allocation5 [shape = 'u8[65536]{0}', space=vmem, size = 0x10000, scoped, tag = 'output window, operand 0']
    %11 = vsyncpa [#allocation3], 0
    %s12 = scalar_lea.sflag [#allocation3], 1
    %13 = vsyncpa %s12, 0
    %14 = vsyncpa [#allocation4], 0
    %s15 = scalar_lea.sflag [#allocation4], 1
    %16 = vsyncpa %s15, 0
    loop: start=0, step=1, limit=4
    $region2: #{tpu_custom_call.1} parent=1 // loop_pre_header
      _
    $region3: #{tpu_custom_call.1} parent=1 // loop_header
      %s18 = sphi 0, %s22
      %p19 = scmp.ge.s32.totalorder %s18, 4
      %s28 = sphi 0, %s30
      %s31 = sphi 0, %s28
      %s32 = sphi 0, %s31
      %s48 = sphi 0, %s32
      %s52 = sphi 0, %s52
      %s54 = sphi 0, %s52
      %s55 = sphi 0, %s54
      %s69 = sphi 0, %s55
      %s73 = sphi 0, %s73
      %s75 = sphi 0, %s73
      %s76 = sphi 0, %s75
      %s90 = sphi 0, %s76
      %s94 = sphi 0, %s94
      %s96 = sphi 0, %s94
      %s97 = sphi 0, %s96
      %s111 = sphi 0, %s97
      %s115 = sphi 0, %s115
      %s117 = sphi 0, %s115
      %s118 = sphi 0, %s117
      %s132 = sphi 0, %s118
      %s136 = sphi 0, %s136
      %s138 = sphi 0, %s136
      %s139 = sphi 0, %s138
      %s153 = sphi 0, %s139
      %s159 = sphi 0, %s161
      %s162 = sphi 0, %s159
      %s163 = sphi 0, %s162
      %s179 = sphi 0, %s163
    $region4: #{tpu_custom_call.1} parent=1 // loop_header_branch
      %21 = sbr.rel (%p19) target = $region8
    $region5: #{tpu_custom_call.1} parent=1 // loop_body
      %s23 = ssub.s32 %s18, 1
      %s24 = ssub.s32 %s18, 2
      %s25 = sadd.s32 %s18, 1
      %s26 = ssub.s32 %s18, %s25
      %p27 = scmp.eq.s32.totalorder %s26, 0
      %s29 = sadd.s32 %s28, 1
      %s30 = scalar_select %p27, %s28, %s29
      %p33 = pneg %p27
      %p34 = scmp.eq.s32.totalorder %s18, 1
      %p35 = por %p33, %p34
      %p36 = scmp.ne.s32.totalorder %s28, %s31
      %p37 = scmp.eq.s32.totalorder %s18, 0
      %p38 = por %p36, %p37
      %p39 = scmp.ne.s32.totalorder %s28, %s31
      %p40 = scmp.eq.s32.totalorder %s23, 1
      %p41 = por %p39, %p40
      %p42 = scmp.ne.s32.totalorder %s31, %s32
      %p43 = scmp.eq.s32.totalorder %s23, 0
      %p44 = por %p42, %p43
      %p45 = scmp.ne.s32.totalorder %s31, %s32
      %p46 = scmp.eq.s32.totalorder %s24, 1
      %p47 = por %p45, %p46
      %p49 = scmp.ne.s32.totalorder %s32, %s48
      %p50 = scmp.eq.s32.totalorder %s24, 0
      %p51 = por %p49, %p50
      %s53 = sadd.s32 %s52, 1
      %p56 = scmp.eq.s32.totalorder %s18, 1
      %p57 = scmp.ne.s32.totalorder %s52, %s54
      %p58 = scmp.eq.s32.totalorder %s18, 0
      %p59 = por %p57, %p58
      %p60 = scmp.ne.s32.totalorder %s52, %s54
      %p61 = scmp.eq.s32.totalorder %s23, 1
      %p62 = por %p60, %p61
      %p63 = scmp.ne.s32.totalorder %s54, %s55
      %p64 = scmp.eq.s32.totalorder %s23, 0
      %p65 = por %p63, %p64
      %p66 = scmp.ne.s32.totalorder %s54, %s55
      %p67 = scmp.eq.s32.totalorder %s24, 1
      %p68 = por %p66, %p67
      %p70 = scmp.ne.s32.totalorder %s55, %s69
      %p71 = scmp.eq.s32.totalorder %s24, 0
      %p72 = por %p70, %p71
      %s74 = sadd.s32 %s73, 1
      %p77 = scmp.eq.s32.totalorder %s18, 1
      %p78 = scmp.ne.s32.totalorder %s73, %s75
      %p79 = scmp.eq.s32.totalorder %s18, 0
      %p80 = por %p78, %p79
      %p81 = scmp.ne.s32.totalorder %s73, %s75
      %p82 = scmp.eq.s32.totalorder %s23, 1
      %p83 = por %p81, %p82
      %p84 = scmp.ne.s32.totalorder %s75, %s76
      %p85 = scmp.eq.s32.totalorder %s23, 0
      %p86 = por %p84, %p85
      %p87 = scmp.ne.s32.totalorder %s75, %s76
      %p88 = scmp.eq.s32.totalorder %s24, 1
      %p89 = por %p87, %p88
      %p91 = scmp.ne.s32.totalorder %s76, %s90
      %p92 = scmp.eq.s32.totalorder %s24, 0
      %p93 = por %p91, %p92
      %s95 = sadd.s32 %s94, 1
      %p98 = scmp.eq.s32.totalorder %s18, 1
      %p99 = scmp.ne.s32.totalorder %s94, %s96
      %p100 = scmp.eq.s32.totalorder %s18, 0
      %p101 = por %p99, %p100
      %p102 = scmp.ne.s32.totalorder %s94, %s96
      %p103 = scmp.eq.s32.totalorder %s23, 1
      %p104 = por %p102, %p103
      %p105 = scmp.ne.s32.totalorder %s96, %s97
      %p106 = scmp.eq.s32.totalorder %s23, 0
      %p107 = por %p105, %p106
      %p108 = scmp.ne.s32.totalorder %s96, %s97
      %p109 = scmp.eq.s32.totalorder %s24, 1
      %p110 = por %p108, %p109
      %p112 = scmp.ne.s32.totalorder %s97, %s111
      %p113 = scmp.eq.s32.totalorder %s24, 0
      %p114 = por %p112, %p113
      %s116 = sadd.s32 %s115, 1
      %p119 = scmp.eq.s32.totalorder %s18, 1
      %p120 = scmp.ne.s32.totalorder %s115, %s117
      %p121 = scmp.eq.s32.totalorder %s18, 0
      %p122 = por %p120, %p121
      %p123 = scmp.ne.s32.totalorder %s115, %s117
      %p124 = scmp.eq.s32.totalorder %s23, 1
      %p125 = por %p123, %p124
      %p126 = scmp.ne.s32.totalorder %s117, %s118
      %p127 = scmp.eq.s32.totalorder %s23, 0
      %p128 = por %p126, %p127
      %p129 = scmp.ne.s32.totalorder %s117, %s118
      %p130 = scmp.eq.s32.totalorder %s24, 1
      %p131 = por %p129, %p130
      %p133 = scmp.ne.s32.totalorder %s118, %s132
      %p134 = scmp.eq.s32.totalorder %s24, 0
      %p135 = por %p133, %p134
      %s137 = sadd.s32 %s136, 1
      %p140 = scmp.eq.s32.totalorder %s18, 1
      %p141 = scmp.ne.s32.totalorder %s136, %s138
      %p142 = scmp.eq.s32.totalorder %s18, 0
      %p143 = por %p141, %p142
      %p144 = scmp.ne.s32.totalorder %s136, %s138
      %p145 = scmp.eq.s32.totalorder %s23, 1
      %p146 = por %p144, %p145
      %p147 = scmp.ne.s32.totalorder %s138, %s139
      %p148 = scmp.eq.s32.totalorder %s23, 0
      %p149 = por %p147, %p148
      %p150 = scmp.ne.s32.totalorder %s138, %s139
      %p151 = scmp.eq.s32.totalorder %s24, 1
      %p152 = por %p150, %p151
      %p154 = scmp.ne.s32.totalorder %s139, %s153
      %p155 = scmp.eq.s32.totalorder %s24, 0
      %p156 = por %p154, %p155
      %s157 = ssub.s32 %s18, %s25
      %p158 = scmp.eq.s32.totalorder %s157, 0
      %s160 = sadd.s32 %s159, 1
      %s161 = scalar_select %p158, %s159, %s160
      %p164 = pneg %p158
      %p165 = scmp.eq.s32.totalorder %s18, 1
      %p166 = por %p164, %p165
      %p167 = scmp.ne.s32.totalorder %s159, %s162
      %p168 = scmp.eq.s32.totalorder %s18, 0
      %p169 = por %p167, %p168
      %p170 = scmp.ne.s32.totalorder %s159, %s162
      %p171 = scmp.eq.s32.totalorder %s23, 1
      %p172 = por %p170, %p171
      %p173 = scmp.ne.s32.totalorder %s162, %s163
      %p174 = scmp.eq.s32.totalorder %s23, 0
      %p175 = por %p173, %p174
      %p176 = scmp.ne.s32.totalorder %s162, %s163
      %p177 = scmp.eq.s32.totalorder %s24, 1
      %p178 = por %p176, %p177
      %p180 = scmp.ne.s32.totalorder %s163, %s179
      %p181 = scmp.eq.s32.totalorder %s24, 0
      %p182 = por %p180, %p181
      %p183 = scmp.le.s32.totalorder 1, %s18
      %p184 = scmp.lt.s32.totalorder %s18, 3
      %p185 = pnand %p183, %p184
      %p186 = pneg %p185
      // Predicated region
      $region9: #{tpu_custom_call.1} parent=5 // pred_check
        _
      $region10: #{tpu_custom_call.1} parent=5 // pred_check_branch
        %188 = sbr.rel (%p185) target = $region12
      $region11: #{tpu_custom_call.1} parent=5 // pred_region
        %s189 = ssub.s32 %s18, 1
        // Predicated region
        $region13: #{tpu_custom_call.1} parent=11 // pred_check
          %p190 = pneg %p65
        $region14: #{tpu_custom_call.1} parent=11 // pred_check_branch
          %192 = sbr.rel (%p190) target = $region16
        $region15: #{tpu_custom_call.1} parent=11 // pred_region
          _
        $region16: #{tpu_custom_call.1} parent=11 // pred_fallthru
          _
        // Predicated region
        $region17: #{tpu_custom_call.1} parent=11 // pred_check
          %p193 = pneg %p86
        $region18: #{tpu_custom_call.1} parent=11 // pred_check_branch
          %195 = sbr.rel (%p193) target = $region20
        $region19: #{tpu_custom_call.1} parent=11 // pred_region
          _
        $region20: #{tpu_custom_call.1} parent=11 // pred_fallthru
          _
        // Predicated region
        $region21: #{tpu_custom_call.1} parent=11 // pred_check
          %p196 = pneg %p107
        $region22: #{tpu_custom_call.1} parent=11 // pred_check_branch
          %198 = sbr.rel (%p196) target = $region24
        $region23: #{tpu_custom_call.1} parent=11 // pred_region
          _
        $region24: #{tpu_custom_call.1} parent=11 // pred_fallthru
          _
        // Predicated region
        $region25: #{tpu_custom_call.1} parent=11 // pred_check
          %p199 = pneg %p128
        $region26: #{tpu_custom_call.1} parent=11 // pred_check_branch
          %201 = sbr.rel (%p199) target = $region28
        $region27: #{tpu_custom_call.1} parent=11 // pred_region
          _
        $region28: #{tpu_custom_call.1} parent=11 // pred_fallthru
          _
        // Predicated region
        $region29: #{tpu_custom_call.1} parent=11 // pred_check
          %p202 = pneg %p149
        $region30: #{tpu_custom_call.1} parent=11 // pred_check_branch
          %204 = sbr.rel (%p202) target = $region32
        $region31: #{tpu_custom_call.1} parent=11 // pred_region
          _
        $region32: #{tpu_custom_call.1} parent=11 // pred_fallthru
          _
      $region12: #{tpu_custom_call.1} parent=5 // pred_fallthru
        _
      %p205 = scmp.lt.s32.totalorder %s18, 2
      // Predicated region
      $region33: #{tpu_custom_call.1} parent=5 // pred_check
        %p206 = pneg %p205
      $region34: #{tpu_custom_call.1} parent=5 // pred_check_branch
        %208 = sbr.rel (%p206) target = $region36
      $region35: #{tpu_custom_call.1} parent=5 // pred_region
        // Predicated region
        $region37: #{tpu_custom_call.1} parent=35 // pred_check
          %p209 = pneg %p38
        $region38: #{tpu_custom_call.1} parent=35 // pred_check_branch
          %211 = sbr.rel (%p209) target = $region40
        $region39: #{tpu_custom_call.1} parent=35 // pred_region
          %s212 = sand.u32 %s28, 1
          %s213 = scalar_lea.sflag [#allocation3], %s212
          %s214 = sand.u32 %s28, 1
          %s215 = smul.addr %s214, 64
          %s216 = scalar_lea.vmem [#allocation2], %s215
          %s218 = ssub.s32 1024, 1024
          %219 = vsyncadd %s213, %s218
          %s220 = smul.addr %s18, 8
          %s221 = smul.addr %s220, 128
          %s222 = scalar_lea.hbm %s0, %s221
          %s223 = sshll.u32 %s216, 4
          %s224 = int_to_ptr.vmem [resolvable:$true] %s223
          %229 = dma.hbm_to_vmem [thread:$0]  %s222, 1024, %s224, %s213, 256, 256, 16
        $region40: #{tpu_custom_call.1} parent=35 // pred_fallthru
          _
      $region36: #{tpu_custom_call.1} parent=5 // pred_fallthru
        _
      %p230 = scmp.le.s32.totalorder 1, %s18
      %p231 = scmp.lt.s32.totalorder %s18, 3
      %p232 = pnand %p230, %p231
      %p233 = pneg %p232
      // Predicated region
      $region41: #{tpu_custom_call.1} parent=5 // pred_check
        _
      $region42: #{tpu_custom_call.1} parent=5 // pred_check_branch
        %235 = sbr.rel (%p232) target = $region44
      $region43: #{tpu_custom_call.1} parent=5 // pred_region
        %s236 = ssub.s32 %s18, 1
        %s237 = sand.u32 %s31, 1
        %s238 = scalar_lea.sflag [#allocation3], %s237
        %s239 = sand.u32 %s31, 1
        %s240 = smul.addr %s239, 64
        %s241 = scalar_lea.vmem [#allocation2], %s240
        // Predicated region
        $region45: #{tpu_custom_call.1} parent=43 // pred_check
          %p242 = pneg %p44
        $region46: #{tpu_custom_call.1} parent=43 // pred_check_branch
          %244 = sbr.rel (%p242) target = $region48
        $region47: #{tpu_custom_call.1} parent=43 // pred_region
          %245 = dma.done %s238, 1024
        $region48: #{tpu_custom_call.1} parent=43 // pred_fallthru
          _
        %s246 = sand.u32 %s31, 1
        %s247 = scalar_lea.sflag [#allocation3], %s246
        %s248 = sand.u32 %s31, 1
        %s249 = smul.addr %s248, 64
        %s250 = scalar_lea.vmem [#allocation2], %s249
        %p251 = pneg %p44
        %p252 = pneg %p41
        %p253 = pneg %p65
        %p254 = pneg %p62
        %p255 = pneg %p86
        %p256 = pneg %p83
        %p257 = pneg %p107
        %p258 = pneg %p104
        %p259 = pneg %p128
        %p260 = pneg %p125
        %p261 = pneg %p149
        %p262 = pneg %p146
        %p263 = pneg %p175
        %p264 = pneg %p172
        %s265 = sand.u32 %s162, 1
        %s266 = scalar_lea.sflag [#allocation4], %s265
        %s267 = sand.u32 %s162, 1
        %s268 = smul.addr %s267, 64
        %s269 = scalar_lea.vmem [#allocation5], %s268
        %v270 = vld [vmem:[%s241] sm:$0xff]
        %v271 = vld [vmem:[%s241 + $0x8] sm:$0xff]
        %v272 = vld [vmem:[%s241 + $0x10] sm:$0xff]
        %v273 = vld [vmem:[%s241 + $0x18] sm:$0xff]
        %v274 = vld [vmem:[%s241 + $0x20] sm:$0xff]
        %v275 = vld [vmem:[%s241 + $0x28] sm:$0xff]
        %v276 = vld [vmem:[%s241 + $0x30] sm:$0xff]
        %v277 = vld [vmem:[%s241 + $0x38] sm:$0xff]
        %v278 = vadd.f32 %v270, %v271
        %279 = vadd.xlane.f32.xlu0 %v278
        %v280 = vpop.xlane.xlu0 %279
        %v281 = vadd.f32 %v272, %v273
        %282 = vadd.xlane.f32.xlu0 %v281
        %v283 = vpop.xlane.xlu0 %282
        %v284 = vadd.f32 %v274, %v275
        %285 = vadd.xlane.f32.xlu0 %v284
        %v286 = vpop.xlane.xlu0 %285
        %v287 = vadd.f32 %v276, %v277
        %288 = vadd.xlane.f32.xlu0 %v287
        %v289 = vpop.xlane.xlu0 %288
        %v290 = vmul.f32 %v280, 0.00390625
        %v291 = vmul.f32 %v283, 0.00390625
        %v292 = vmul.f32 %v286, 0.00390625
        %v293 = vmul.f32 %v289, 0.00390625
        %v294 = vld [vmem:[%s1] sm:$0xff]
        %v295 = vld [vmem:[%s1 + $0x8] sm:$0xff]
        %v296 = vld [vmem:[%s1 + $0x10] sm:$0xff]
        %v297 = vld [vmem:[%s1 + $0x18] sm:$0xff]
        %v298 = vld [vmem:[%s2] sm:$0x1]
        %v303 = vlaneseq
        %v304 = vand.u32 %v303, 127
        %v305 = vlaneseq
        %v306 = vshrl.u32 %v305, 7
        %v307 = vsub.s32 %v304, %v306
        %v308 = vrot.slane %v290, %v307
        %v309 = vadd.s32 %v304, 4294967288
        %v310 = vlaneseq
        %v311 = vshrl.u32 %v310, 7
        %v312 = vsub.s32 %v309, %v311
        %v313 = vrot.slane %v291, %v312
        %vm314 = vcmask 130112
        %v315 = vsel %vm314, %v313, %v308
        %v316 = vadd.s32 %v304, 4294967280
        %v317 = vlaneseq
        %v318 = vshrl.u32 %v317, 7
        %v319 = vsub.s32 %v316, %v318
        %v320 = vrot.slane %v292, %v319
        %vm321 = vcmask 195712
        %v322 = vsel %vm321, %v320, %v315
        %v323 = vadd.s32 %v304, 4294967272
        %v324 = vlaneseq
        %v325 = vshrl.u32 %v324, 7
        %v326 = vsub.s32 %v323, %v325
        %v327 = vrot.slane %v293, %v326
        %vm328 = vcmask 261312
        %v329 = vsel %vm328, %v327, %v322
        %vm330 = vcmask 261120
        %v331 = vsel %vm330, %v329, 0
        %333 = vmatprep.subr.mxu0 0.0
        %334 = vmatpush1.msra.mxu0 %v294
        %335 = vmatprep.subr.mxu0 0.0
        %336 = vmatpush1.msra.mxu0 %v295
        %337 = vmatprep.subr.mxu0 0.0
        %338 = vmatpush1.msra.mxu0 %v296
        %339 = vmatprep.subr.mxu0 0.0
        %340 = vmatpush1.msra.mxu0 %v297
        %341 = vmatprep.subr.mxu0 0.0
        %342 = vmatpush1.msra.mxu0 0.0
        %343 = vmatprep.subr.mxu0 0.0
        %344 = vmatpush1.msra.mxu0 0.0
        %345 = vmatprep.subr.mxu0 0.0
        %346 = vmatpush1.msra.mxu0 0.0
        %347 = vmatprep.subr.mxu0 0.0
        %348 = vmatpush1.msra.mxu0 0.0
        %349 = vmatprep.subr.mxu0 0.0
        %350 = vmatpush1.msra.mxu0 0.0
        %351 = vmatprep.subr.mxu0 0.0
        %352 = vmatpush1.msra.mxu0 0.0
        %353 = vmatprep.subr.mxu0 0.0
        %354 = vmatpush1.msra.mxu0 0.0
        %355 = vmatprep.subr.mxu0 0.0
        %356 = vmatpush1.msra.mxu0 0.0
        %357 = vmatprep.subr.mxu0 0.0
        %358 = vmatpush1.msra.mxu0 0.0
        %359 = vmatprep.subr.mxu0 0.0
        %360 = vmatpush1.msra.mxu0 0.0
        %361 = vmatprep.subr.mxu0 0.0
        %362 = vmatpush1.msra.mxu0 0.0
        %363 = vmatprep.subr.mxu0 0.0
        %364 = vmatpush1.msra.mxu0 0.0
        %365 = vmatprep.subr.mxu0 0.0
        %366 = vmatpush1.msra.mxu0 0.0
        %367 = vmatprep.subr.mxu0 0.0
        %368 = vmatpush1.msra.mxu0 0.0
        %369 = vmatprep.subr.mxu0 0.0
        %370 = vmatpush1.msra.mxu0 0.0
        %371 = vmatprep.subr.mxu0 0.0
        %372 = vmatpush1.msra.mxu0 0.0
        %373 = vmatprep.subr.mxu0 0.0
        %374 = vmatpush1.msra.mxu0 0.0
        %375 = vmatprep.subr.mxu0 0.0
        %376 = vmatpush1.msra.mxu0 0.0
        %377 = vmatprep.subr.mxu0 0.0
        %378 = vmatpush1.msra.mxu0 0.0
        %379 = vmatprep.subr.mxu0 0.0
        %380 = vmatpush1.msra.mxu0 0.0
        %381 = vmatprep.subr.mxu0 0.0
        %382 = vmatpush1.msra.mxu0 0.0
        %383 = vmatprep.subr.mxu0 0.0
        %384 = vmatpush1.msra.mxu0 0.0
        %385 = vmatprep.subr.mxu0 0.0
        %386 = vmatpush1.msra.mxu0 0.0
        %387 = vmatprep.subr.mxu0 0.0
        %388 = vmatpush1.msra.mxu0 0.0
        %389 = vmatprep.subr.mxu0 0.0
        %390 = vmatpush1.msra.mxu0 0.0
        %391 = vmatprep.subr.mxu0 0.0
        %392 = vmatpush1.msra.mxu0 0.0
        %393 = vmatprep.subr.mxu0 0.0
        %394 = vmatpush1.msra.mxu0 0.0
        %395 = vmatprep.subr.mxu0 0.0
        %396 = vmatpush1.msra.mxu0 0.0
        %397 = vmatprep.mubr.f32.mxu0 0.0
        %398 = vmatmul.mubr.f32.gmra.mrb[0].mxu0 %v331
        %v399 = vpop.f32.mrb[0].mxu0
        %v400 = vadd.f32 %v298, %v399
        %v401 = vpop.f32.mrb[0].mxu0
        %402 = vdwg.mxu0
        %v403 = vmax.f32 %v400, 0.0
        %v404 = vld [vmem:[%s3] sm:$0xff]
        %v405 = vld [vmem:[%s4] sm:$0x1]
        %vm406 = vcmask 64512
        %v408 = vsel %vm406, %v403, 0
        %410 = vmatprep.subr.mxu0 0.0
        %411 = vmatpush1.msra.mxu0 %v404
        %412 = vmatprep.subr.mxu0 0.0
        %413 = vmatpush1.msra.mxu0 0.0
        %414 = vmatprep.subr.mxu0 0.0
        %415 = vmatpush1.msra.mxu0 0.0
        %416 = vmatprep.subr.mxu0 0.0
        %417 = vmatpush1.msra.mxu0 0.0
        %418 = vmatprep.subr.mxu0 0.0
        %419 = vmatpush1.msra.mxu0 0.0
        %420 = vmatprep.subr.mxu0 0.0
        %421 = vmatpush1.msra.mxu0 0.0
        %422 = vmatprep.subr.mxu0 0.0
        %423 = vmatpush1.msra.mxu0 0.0
        %424 = vmatprep.subr.mxu0 0.0
        %425 = vmatpush1.msra.mxu0 0.0
        %426 = vmatprep.subr.mxu0 0.0
        %427 = vmatpush1.msra.mxu0 0.0
        %428 = vmatprep.subr.mxu0 0.0
        %429 = vmatpush1.msra.mxu0 0.0
        %430 = vmatprep.subr.mxu0 0.0
        %431 = vmatpush1.msra.mxu0 0.0
        %432 = vmatprep.subr.mxu0 0.0
        %433 = vmatpush1.msra.mxu0 0.0
        %434 = vmatprep.subr.mxu0 0.0
        %435 = vmatpush1.msra.mxu0 0.0
        %436 = vmatprep.subr.mxu0 0.0
        %437 = vmatpush1.msra.mxu0 0.0
        %438 = vmatprep.subr.mxu0 0.0
        %439 = vmatpush1.msra.mxu0 0.0
        %440 = vmatprep.subr.mxu0 0.0
        %441 = vmatpush1.msra.mxu0 0.0
        %442 = vmatprep.subr.mxu0 0.0
        %443 = vmatpush1.msra.mxu0 0.0
        %444 = vmatprep.subr.mxu0 0.0
        %445 = vmatpush1.msra.mxu0 0.0
        %446 = vmatprep.subr.mxu0 0.0
        %447 = vmatpush1.msra.mxu0 0.0
        %448 = vmatprep.subr.mxu0 0.0
        %449 = vmatpush1.msra.mxu0 0.0
        %450 = vmatprep.subr.mxu0 0.0
        %451 = vmatpush1.msra.mxu0 0.0
        %452 = vmatprep.subr.mxu0 0.0
        %453 = vmatpush1.msra.mxu0 0.0
        %454 = vmatprep.subr.mxu0 0.0
        %455 = vmatpush1.msra.mxu0 0.0
        %456 = vmatprep.subr.mxu0 0.0
        %457 = vmatpush1.msra.mxu0 0.0
        %458 = vmatprep.subr.mxu0 0.0
        %459 = vmatpush1.msra.mxu0 0.0
        %460 = vmatprep.subr.mxu0 0.0
        %461 = vmatpush1.msra.mxu0 0.0
        %462 = vmatprep.subr.mxu0 0.0
        %463 = vmatpush1.msra.mxu0 0.0
        %464 = vmatprep.subr.mxu0 0.0
        %465 = vmatpush1.msra.mxu0 0.0
        %466 = vmatprep.subr.mxu0 0.0
        %467 = vmatpush1.msra.mxu0 0.0
        %468 = vmatprep.subr.mxu0 0.0
        %469 = vmatpush1.msra.mxu0 0.0
        %470 = vmatprep.subr.mxu0 0.0
        %471 = vmatpush1.msra.mxu0 0.0
        %472 = vmatprep.subr.mxu0 0.0
        %473 = vmatpush1.msra.mxu0 0.0
        %474 = vmatprep.mubr.f32.mxu0 0.0
        %475 = vmatmul.mubr.f32.gmra.mrb[0].mxu0 %v408
        %v476 = vpop.f32.mrb[0].mxu0
        %v477 = vadd.f32 %v405, %v476
        %v478 = vpop.f32.mrb[0].mxu0
        %479 = vdwg.mxu0
        %v480 = vld [vmem:[%s5] sm:$0x1]
        %v482 = vsel %vm330, %v480, 0
        %484 = vmatprep.subr.mxu0 %v271
        %485 = vmatpush1.msra.mxu0 %v270
        %486 = vmatprep.subr.mxu0 %v273
        %487 = vmatpush1.msra.mxu0 %v272
        %488 = vmatprep.subr.mxu0 %v275
        %489 = vmatpush1.msra.mxu0 %v274
        %490 = vmatprep.subr.mxu0 %v277
        %491 = vmatpush1.msra.mxu0 %v276
        %492 = vmatprep.subr.mxu0 0.0
        %493 = vmatpush1.msra.mxu0 0.0
        %494 = vmatprep.subr.mxu0 0.0
        %495 = vmatpush1.msra.mxu0 0.0
        %496 = vmatprep.subr.mxu0 0.0
        %497 = vmatpush1.msra.mxu0 0.0
        %498 = vmatprep.subr.mxu0 0.0
        %499 = vmatpush1.msra.mxu0 0.0
        %500 = vmatprep.subr.mxu0 0.0
        %501 = vmatpush1.msra.mxu0 0.0
        %502 = vmatprep.subr.mxu0 0.0
        %503 = vmatpush1.msra.mxu0 0.0
        %504 = vmatprep.subr.mxu0 0.0
        %505 = vmatpush1.msra.mxu0 0.0
        %506 = vmatprep.subr.mxu0 0.0
        %507 = vmatpush1.msra.mxu0 0.0
        %508 = vmatprep.subr.mxu0 0.0
        %509 = vmatpush1.msra.mxu0 0.0
        %510 = vmatprep.subr.mxu0 0.0
        %511 = vmatpush1.msra.mxu0 0.0
        %512 = vmatprep.subr.mxu0 0.0
        %513 = vmatpush1.msra.mxu0 0.0
        %514 = vmatprep.subr.mxu0 0.0
        %515 = vmatpush1.msra.mxu0 0.0
        %516 = vmatprep.subr.mxu0 0.0
        %517 = vmatpush1.msra.mxu0 0.0
        %518 = vmatprep.subr.mxu0 0.0
        %519 = vmatpush1.msra.mxu0 0.0
        %520 = vmatprep.subr.mxu0 0.0
        %521 = vmatpush1.msra.mxu0 0.0
        %522 = vmatprep.subr.mxu0 0.0
        %523 = vmatpush1.msra.mxu0 0.0
        %524 = vmatprep.subr.mxu0 0.0
        %525 = vmatpush1.msra.mxu0 0.0
        %526 = vmatprep.subr.mxu0 0.0
        %527 = vmatpush1.msra.mxu0 0.0
        %528 = vmatprep.subr.mxu0 0.0
        %529 = vmatpush1.msra.mxu0 0.0
        %530 = vmatprep.subr.mxu0 0.0
        %531 = vmatpush1.msra.mxu0 0.0
        %532 = vmatprep.subr.mxu0 0.0
        %533 = vmatpush1.msra.mxu0 0.0
        %534 = vmatprep.subr.mxu0 0.0
        %535 = vmatpush1.msra.mxu0 0.0
        %536 = vmatprep.subr.mxu0 0.0
        %537 = vmatpush1.msra.mxu0 0.0
        %538 = vmatprep.subr.mxu0 0.0
        %539 = vmatpush1.msra.mxu0 0.0
        %540 = vmatprep.subr.mxu0 0.0
        %541 = vmatpush1.msra.mxu0 0.0
        %542 = vmatprep.subr.mxu0 0.0
        %543 = vmatpush1.msra.mxu0 0.0
        %544 = vmatprep.subr.mxu0 0.0
        %545 = vmatpush1.msra.mxu0 0.0
        %546 = vmatprep.subr.mxu0 0.0
        %547 = vmatpush1.msra.mxu0 0.0
        %548 = vmatprep.mubr.f32.mxu0 0.0
        %549 = vmatmul.mubr.f32.gmra.mrb[0].mxu0 %v482
        %v550 = vpop.f32.mrb[0].mxu0
        %v551 = vadd.f32 0.0, %v550
        %v552 = vpop.f32.mrb[0].mxu0
        %v553 = vadd.f32 0.0, %v552
        %554 = vdwg.mxu0
        %v555 = vxor.u32 %v551, 2147483648
        %v556 = vxor.u32 %v553, 2147483648
        %v557 = vmul.f32 %v555, 1.442695
        %v558 = vpow.pop %v557
        %v559 = vmul.f32 %v556, 1.442695
        %v560 = vpow.pop %v559
        %v561 = vadd.f32 %v558, 1.0
        %v562 = vadd.f32 %v560, 1.0
        %v563 = vrcp.pop %v561
        %v564 = vmul.f32 1.0, %v563
        %v565 = vrcp.pop %v562
        %v566 = vmul.f32 1.0, %v565
        %v567 = vld [vmem:[%s241] sm:$0xff]
        %v568 = vld [vmem:[%s241 + $0x8] sm:$0xff]
        %v569 = vld [vmem:[%s241 + $0x10] sm:$0xff]
        %v570 = vld [vmem:[%s241 + $0x18] sm:$0xff]
        %v571 = vld [vmem:[%s241 + $0x20] sm:$0xff]
        %v572 = vld [vmem:[%s241 + $0x28] sm:$0xff]
        %v573 = vld [vmem:[%s241 + $0x30] sm:$0xff]
        %v574 = vld [vmem:[%s241 + $0x38] sm:$0xff]
        %v575 = vlaneseq
        %v576 = vshrl.u32 %v575, 7
        %v577 = vsub.s32 0, %v576
        %v578 = vrot.slane %v477, %v577
        %580 = vbcast.lane.b32.xlu0 %v578, 256
        %v581 = vpop.permute.xlu0 %580
        %s583 = sor.u32 256, 8
        %584 = vbcast.lane.b32.xlu0 %v578, %s583
        %v585 = vpop.permute.xlu0 %584
        %s587 = sor.u32 256, 16
        %588 = vbcast.lane.b32.xlu0 %v578, %s587
        %v589 = vpop.permute.xlu0 %588
        %s591 = sor.u32 256, 24
        %592 = vbcast.lane.b32.xlu0 %v578, %s591
        %v593 = vpop.permute.xlu0 %592
        %v594 = vmul.f32 %v567, %v581
        %v595 = vmul.f32 %v568, %v581
        %v596 = vmul.f32 %v569, %v585
        %v597 = vmul.f32 %v570, %v585
        %v598 = vmul.f32 %v571, %v589
        %v599 = vmul.f32 %v572, %v589
        %v600 = vmul.f32 %v573, %v593
        %v601 = vmul.f32 %v574, %v593
        %v602 = vlaneseq
        %v603 = vshrl.u32 %v602, 7
        %v604 = vsub.s32 0, %v603
        %v605 = vrot.slane %v564, %v604
        %v606 = vlaneseq
        %v607 = vshrl.u32 %v606, 7
        %v608 = vsub.s32 0, %v607
        %v609 = vrot.slane %v566, %v608
        %v610 = vmul.f32 %v594, %v605
        %v611 = vmul.f32 %v595, %v609
        %v612 = vmul.f32 %v596, %v605
        %v613 = vmul.f32 %v597, %v609
        %v614 = vmul.f32 %v598, %v605
        %v615 = vmul.f32 %v599, %v609
        %v616 = vmul.f32 %v600, %v605
        %v617 = vmul.f32 %v601, %v609
        %618 = vst [vmem:[%s269] sm:$0xff] %v610
        %619 = vst [vmem:[%s269 + $0x8] sm:$0xff] %v611
        %620 = vst [vmem:[%s269 + $0x10] sm:$0xff] %v612
        %621 = vst [vmem:[%s269 + $0x18] sm:$0xff] %v613
        %622 = vst [vmem:[%s269 + $0x20] sm:$0xff] %v614
        %623 = vst [vmem:[%s269 + $0x28] sm:$0xff] %v615
        %624 = vst [vmem:[%s269 + $0x30] sm:$0xff] %v616
        %625 = vst [vmem:[%s269 + $0x38] sm:$0xff] %v617
        %s626 = sand.u32 %s162, 1
        %s627 = scalar_lea.sflag [#allocation4], %s626
        %s628 = sand.u32 %s162, 1
        %s629 = smul.addr %s628, 64
        %s630 = scalar_lea.vmem [#allocation5], %s629
        // Predicated region
        $region49: #{tpu_custom_call.1} parent=43 // pred_check
          %p631 = pneg %p172
        $region50: #{tpu_custom_call.1} parent=43 // pred_check_branch
          %633 = sbr.rel (%p631) target = $region52
        $region51: #{tpu_custom_call.1} parent=43 // pred_region
          %s635 = ssub.s32 1024, 1024
          %636 = vsyncadd %s627, %s635
          %s637 = smul.addr %s23, 8
          %s638 = smul.addr %s637, 128
          %s639 = scalar_lea.hbm %s6, %s638
          %s640 = sshll.u32 %s630, 4
          %s641 = int_to_ptr.vmem [resolvable:$true] %s640
          %646 = dma.vmem_to_hbm [thread:$0]  %s641, 1024, %s639, %s627, 256, 256, 16
        $region52: #{tpu_custom_call.1} parent=43 // pred_fallthru
          _
      $region44: #{tpu_custom_call.1} parent=5 // pred_fallthru
        _
      %p647 = scmp.le.s32.totalorder 2, %s18
      // Predicated region
      $region53: #{tpu_custom_call.1} parent=5 // pred_check
        %p648 = pneg %p647
      $region54: #{tpu_custom_call.1} parent=5 // pred_check_branch
        %650 = sbr.rel (%p648) target = $region56
      $region55: #{tpu_custom_call.1} parent=5 // pred_region
        %s651 = ssub.s32 %s18, 2
        // Predicated region
        $region57: #{tpu_custom_call.1} parent=55 // pred_check
          %p652 = pneg %p178
        $region58: #{tpu_custom_call.1} parent=55 // pred_check_branch
          %654 = sbr.rel (%p652) target = $region60
        $region59: #{tpu_custom_call.1} parent=55 // pred_region
          %s655 = sand.u32 %s163, 1
          %s656 = scalar_lea.sflag [#allocation4], %s655
          %s657 = sand.u32 %s163, 1
          %s658 = smul.addr %s657, 64
          %s659 = scalar_lea.vmem [#allocation5], %s658
          %660 = dma.done %s656, 1024
        $region60: #{tpu_custom_call.1} parent=55 // pred_fallthru
          _
      $region56: #{tpu_custom_call.1} parent=5 // pred_fallthru
        _
    $region6: #{tpu_custom_call.1} parent=1 // loop_footer
      %s22 = sadd.s32 1, %s18
    $region7: #{tpu_custom_call.1} parent=1 // loop_footer_branch
      %17 = sbr.rel target = $region3
    $region8: #{tpu_custom_call.1} parent=1 // loop_exit
      _
    %661 = vsyncpa [#allocation3], 1
    %s662 = scalar_lea.sflag [#allocation3], 1
    %663 = vsyncpa %s662, 1
    %664 = vsyncpa [#allocation4], 1
    %s665 = scalar_lea.sflag [#allocation4], 1
    %666 = vsyncpa %s665, 1

</llo_original>
